<compile_context>
chip_gen: v7x
topology: tpu7x:2x2x1
jax: 0.10.0
libtpu: 0.0.40
codegen_flags: <defaults>
</compile_context>

<pallas_src>
import functools
import math

import jax
import jax.numpy as jnp
import numpy as np
from jax.experimental import pallas as pl
from jax.experimental.pallas import tpu as pltpu


# --------------------------------------------------------------------------- #
# Kernel: one (batch, P-tile) output block.
# --------------------------------------------------------------------------- #
def _features_map_kernel(feat_ref, tgt_ref, out_ref, *, tile_p):
    # feat_ref: (1, C, N)      compute dtype -- "-1"-masked features (precomputed)
    # tgt_ref:  (1, N, 1)      int32         -- flat map index per token, -1 = drop
    # out_ref:  (1, C, tile_p)               -- P tile pl.program_id(1) of the map
    n_tok = tgt_ref.shape[1]
    p0 = pl.program_id(1) * tile_p
    # Shift the (N, 1) scalar side instead of adding p0 to the (N, tile_p) iota.
    tgt = tgt_ref[0] - p0                                             # (N, 1)
    iota = jax.lax.broadcasted_iota(jnp.int32, (n_tok, tile_p), 1)    # (N, tile_p)
    onehot = (iota == tgt).astype(feat_ref.dtype)                     # (N, tile_p)
    out_ref[0] = jnp.dot(feat_ref[0], onehot,
                         preferred_element_type=jnp.float32).astype(out_ref.dtype)


# --------------------------------------------------------------------------- #
# Hoisted per-batch prework (runs once per call in plain JAX, not per P tile).
# --------------------------------------------------------------------------- #
def _precompute(features, ys, xs, max_h, max_w, f_size):
    ys = ys.astype(jnp.int32)
    xs = xs.astype(jnp.int32)
    real = ys > -1                                                    # (B, N)
    big = jnp.int32(1 << 30)
    # TODO(synk): an all-padding batch (ys == -1 everywhere) falls back to the
    # +/-2^30 sentinels and yields an all-zero map; PyTorch would raise instead.
    min_y = jnp.min(jnp.where(real, ys, big), axis=1, keepdims=True)
    max_y = jnp.max(jnp.where(real, ys, -big), axis=1, keepdims=True)
    min_x = jnp.min(jnp.where(real, xs, big), axis=1, keepdims=True)
    max_x = jnp.max(jnp.where(real, xs, -big), axis=1, keepdims=True)

    height = (max_y - min_y + 1) * f_size
    width = (max_x - min_x + 1) * f_size
    swap = width > height                       # torch: tmp.transpose(-1, -2)
    h0 = jnp.where(swap, width, height)
    w0 = jnp.where(swap, height, width)

    h_dif = h0 - max_h
    w_dif = w0 - max_w
    # validation-mode (deterministic) center crop / pad:
    #   crop: cut_top = ceil(h_dif/2)  -> shift targets by -cut_top
    #   pad : pad_top = ceil(-h_dif/2) -> shift targets by +pad_top
    # (torch calls F.pad with (pad_right, pad_left, ...) so `pad_right` lands on
    #  the LEFT of the last dim -- replicated here.)
    off_y = jnp.where(h_dif > 0, -((h_dif + 1) // 2), ((-h_dif) + 1) // 2)
    off_x = jnp.where(w_dif > 0, -((w_dif + 1) // 2), ((-w_dif) + 1) // 2)

    yy = jnp.where(swap, xs - min_x, ys - min_y) + off_y              # (B, N)
    xx = jnp.where(swap, ys - min_y, xs - min_x) + off_x              # (B, N)
    valid = real & (yy >= 0) & (yy < max_h) & (xx >= 0) & (xx < max_w)
    tgt = jnp.where(valid, yy * max_w + xx, jnp.int32(-1))            # (B, N)
    # TODO(synk): duplicate (y, x) among real tokens: the torch scatter is
    # last-write-wins while the one-hot matmul sums; unique coordinates assumed.

    # Token-side handling of the torch "-1" channel mask: any channel equal to an
    # exact -1.0 masks that pixel to backend_feature == 0, so zero the token's
    # whole feature column (C*N work once, instead of C*P work per tile).
    bad = jnp.any(features == jnp.float32(-1.0), axis=1, keepdims=True)  # (B,1,N)
    feat_eff = jnp.where(bad, jnp.zeros((), features.dtype), features)   # (B,C,N)
    return feat_eff, tgt[:, :, None]                                  # (B, N, 1)


def _vmem_budget():
    """VMEM capacity-aware budgets (v7x: 64 MiB/TC, v5e/v6e: 128 MiB)."""
    try:
        cap = int(pltpu.get_tpu_info().vmem_capacity_bytes)
    except Exception:
        cap = 64 * 1024 * 1024          # conservative fallback (v7x-sized)
    tile_budget = int(cap * 0.60)       # what the per-step working set may use
    vmem_limit = int(cap * 0.75)        # leave headroom for compiler scratch
    return tile_budget, vmem_limit


def _pick_tile_p(p_total, c_ch, n_tok, cd_bytes, out_bytes, budget, max_tile_p):
    # Per-step footprint: double-buffered out block + onehot + iota temps,
    # plus resident (double-buffered) features and targets.
    per_p = 2 * c_ch * out_bytes + n_tok * (cd_bytes + 4)
    fixed = 2 * c_ch * n_tok * cd_bytes + 4 * n_tok * 4
    avail = budget - fixed
    cap = 128
    if avail > per_p * 128:
        cap = (avail // per_p) // 128 * 128
    tile = int(max(min(cap, max_tile_p), 128))
    if tile >= p_total:
        return int(p_total), 1          # single full-extent block (exempt from /128)
    return tile, int(pl.cdiv(p_total, tile))


# --------------------------------------------------------------------------- #
# Public wrapper.
# --------------------------------------------------------------------------- #
def features_map(features, ys, xs, *, max_height, max_width, f_size=1,
                 compute_dtype=None, max_tile_p=2048):
    """Pallas equivalent of FeaturesMap.forward (eval mode, dummy='zero').

    compute_dtype=jnp.bfloat16 enables the native-bf16 MXU path (one-hot
    selection stays exact; feature values round to bf16).  Default keeps f32.
    """
    # TODO(synk): training-mode augmentation (random crop offsets / flips via
    # Python `random`), f_size > 1 block scatter, mask_out=True second output and
    # the non-zero dummy backends ('self_mean' / 'zero_f' / 'mean_f', which load
    # tensors from disk) are not implemented.
    assert f_size == 1
    assert max_tile_p % 128 == 0
    b_sz, c_ch, n_tok = features.shape
    p_total = max_height * max_width
    out_dtype = features.dtype
    compute_dtype = out_dtype if compute_dtype is None else compute_dtype

    tile_budget, vmem_limit = _vmem_budget()
    tile_p, n_pt = _pick_tile_p(
        p_total, c_ch, n_tok,
        cd_bytes=jnp.dtype(compute_dtype).itemsize,
        out_bytes=jnp.dtype(out_dtype).itemsize,
        budget=tile_budget, max_tile_p=max_tile_p)

    # Hoisted per-batch prework: done once here, not once per P tile.
    feat_eff, tgt = _precompute(features, ys, xs, max_height, max_width, f_size)
    feat_eff = feat_eff.astype(compute_dtype)

    kernel = functools.partial(_features_map_kernel, tile_p=tile_p)

    out_flat = pl.pallas_call(
        kernel,
        # Unpadded output: Pallas masks the ragged last P tile, so there is no
        # pad-then-slice extra HBM round trip.
        out_shape=jax.ShapeDtypeStruct((b_sz, c_ch, p_total), out_dtype),
        grid_spec=pltpu.PrefetchScalarGridSpec(
            num_scalar_prefetch=0,
            grid=(b_sz, n_pt),
            in_specs=[
                pl.BlockSpec((1, c_ch, n_tok), lambda b, pt: (b, 0, 0)),  # feat_eff
                pl.BlockSpec((1, n_tok, 1), lambda b, pt: (b, 0, 0)),     # tgt
            ],
            out_specs=pl.BlockSpec((1, c_ch, tile_p), lambda b, pt: (b, 0, pt)),
        ),
        compiler_params=pltpu.CompilerParams(
            dimension_semantics=("parallel", "parallel"),
            vmem_limit_bytes=vmem_limit),
    )(feat_eff, tgt)

    return out_flat.reshape(b_sz, c_ch, max_height, max_width)


# --------------------------------------------------------------------------- #
# Pure NumPy port of the PyTorch forward (validation=True, dummy='zero').
# --------------------------------------------------------------------------- #
def _reference(features, ys, xs, max_h, max_w):
    features = np.asarray(features, dtype=np.float32)
    ys = np.asarray(ys)
    xs = np.asarray(xs)
    b_sz, c_ch, _ = features.shape
    out = np.zeros((b_sz, c_ch, max_h, max_w), dtype=np.float32)
    for b in range(b_sz):
        m = ys[b] > -1
        min_y, max_y = ys[b, m].min(), ys[b, m].max()
        min_x, max_x = xs[b, m].min(), xs[b, m].max()
        h = int(max_y - min_y + 1)
        w = int(max_x - min_x + 1)
        tmp = np.full((c_ch, h, w), -1.0, dtype=np.float32)
        tmp[:, ys[b, m] - min_y, xs[b, m] - min_x] = features[b][:, m]
        if w > h:
            tmp = np.swapaxes(tmp, -1, -2)
        _, h, w = tmp.shape
        h_dif, w_dif = h - max_h, w - max_w
        if h_dif > 0:
            cut_top = math.ceil(h_dif / 2)
            cut_bottom = h - (h_dif - cut_top)
            pad_top = pad_bottom = 0
        else:
            pad_top = math.ceil(-h_dif / 2)
            pad_bottom = -h_dif - pad_top
            cut_top, cut_bottom = 0, h
        if w_dif > 0:
            cut_left = math.ceil(w_dif / 2)
            cut_right = w - (w_dif - cut_left)
            pad_r = pad_l = 0
        else:
            pad_r = math.ceil(-w_dif / 2)
            pad_l = -w_dif - pad_r
            cut_left, cut_right = 0, w
        tmp = tmp[:, cut_top:cut_bottom, cut_left:cut_right]
        tmp = np.pad(tmp, ((0, 0), (pad_top, pad_bottom), (pad_r, pad_l)),
                     constant_values=-1.0)
        mask = (tmp != -1).all(axis=0)
        out[b] = np.where(mask, tmp, 0.0)
    return out


if __name__ == "__main__":
    B, C, N = 3, 32, 8          # batch, f_channels, tokens
    MAX_H, MAX_W = 20, 16       # max_height, max_width (f_size = 1) -> P = 320

    key = jax.random.PRNGKey(0)
    features = jax.random.normal(key, (B, C, N), dtype=jnp.float32)
    # A token whose feature contains an exact -1.0 -> torch masks that pixel to 0.
    features = features.at[0, 7, 2].set(-1.0)

    # Batch 0: small 3x2 patch (pad-only path; padding tokens marked with ys = -1).
    # Batch 1: wide 1x31 strip -> transpose + center-crop path (some tokens cut).
    # Batch 2: tall 15x6 patch -> pad-both path, no transpose.
    ys = jnp.array([[3, 3, 4, 4, 5, 5, -1, -1],
                    [5, 5, 5, 5, 5, 5, 5, 5],
                    [0, 2, 4, 6, 8, 10, 12, 14]], dtype=jnp.int32)
    xs = jnp.array([[2, 3, 2, 3, 2, 3, 0, 0],
                    [0, 4, 8, 12, 16, 20, 25, 30],
                    [0, 1, 2, 3, 4, 5, 0, 1]], dtype=jnp.int32)

    ref = _reference(np.array(features), np.array(ys), np.array(xs), MAX_H, MAX_W)

    # 1) Exact f32 path; max_tile_p=128 forces a multi-tile P sweep with a ragged
    #    final tile (320 -> 128 + 128 + 64) exercising the masked last-block store.
    out_f32 = features_map(features, ys, xs, max_height=MAX_H, max_width=MAX_W,
                           f_size=1, max_tile_p=128)
    out_f32 = jax.block_until_ready(out_f32)
    np.testing.assert_allclose(np.array(out_f32), ref, rtol=1e-5, atol=1e-5)
    assert out_f32.shape == (B, C, MAX_H, MAX_W)

    # 2) bf16 MXU path (default tile sizing -> single full-extent P block).
    out_bf16 = features_map(features, ys, xs, max_height=MAX_H, max_width=MAX_W,
                            f_size=1, compute_dtype=jnp.bfloat16)
    out_bf16 = jax.block_until_ready(out_bf16)
    np.testing.assert_allclose(np.array(out_bf16), ref, rtol=2e-2, atol=2e-2)

    print("KERNEL_OK")
</pallas_src>

<mosaic_0001>
module attributes {stable_mosaic.version = 11 : i64} {
  func.func @_features_map_kernel(%arg0: i32, %arg1: i32, %arg2: memref<1x32x8xf32, #tpu.memory_space<vmem>>, %arg3: memref<1x8x1xi32, #tpu.memory_space<vmem>>, %arg4: memref<1x32x128xf32, #tpu.memory_space<vmem>>) attributes {dimension_semantics = [#tpu.dimension_semantics<parallel>, #tpu.dimension_semantics<parallel>], iteration_bounds = array<i64: 3, 3>, scalar_prefetch = 0 : i64, scratch_operands = 0 : i64, tpu.core_type = #tpu.core_type<tc>, window_params = [{transform_indices = @transform_0, window_bounds = array<i64: 1, 32, 8>}, {transform_indices = @transform_1, window_bounds = array<i64: 1, 8, 1>}, {transform_indices = @transform_2, window_bounds = array<i64: 1, 32, 128>}]} {
    %c128_i32 = arith.constant 128 : i32
    %0 = arith.muli %arg1, %c128_i32 : i32
    %c0 = arith.constant 0 : index
    %c0_0 = arith.constant 0 : index
    %c0_1 = arith.constant 0 : index
    %1 = vector.load %arg3[%c0, %c0_0, %c0_1] : memref<1x8x1xi32, #tpu.memory_space<vmem>>, vector<1x8x1xi32>
    %2 = vector.shape_cast %1 : vector<1x8x1xi32> to vector<8x1xi32>
    %3 = vector.broadcast %0 : i32 to vector<8x1xi32>
    %4 = arith.subi %2, %3 : vector<8x1xi32>
    %5 = tpu.iota {dimensions = array<i32: 1>} : vector<8x128xi32>
    %6 = vector.broadcast %4 : vector<8x1xi32> to vector<8x128xi32>
    %7 = arith.cmpi eq, %5, %6 : vector<8x128xi32>
    %8 = arith.extui %7 : vector<8x128xi1> to vector<8x128xi32>
    %9 = arith.sitofp %8 : vector<8x128xi32> to vector<8x128xf32>
    %c0_2 = arith.constant 0 : index
    %c0_3 = arith.constant 0 : index
    %c0_4 = arith.constant 0 : index
    %10 = vector.load %arg2[%c0_2, %c0_3, %c0_4] : memref<1x32x8xf32, #tpu.memory_space<vmem>>, vector<1x32x8xf32>
    %11 = vector.shape_cast %10 : vector<1x32x8xf32> to vector<32x8xf32>
    %cst = arith.constant dense<0.000000e+00> : vector<32x128xf32>
    %12 = tpu.matmul %11, %9, %cst {dimension_numbers = #tpu.dot_dimension_numbers<[1], [0], [0], [1], [0, 0, 1, 1], [], []>} : vector<32x8xf32>, vector<8x128xf32>, vector<32x128xf32> -> vector<32x128xf32>
    %c0_5 = arith.constant 0 : index
    %c0_6 = arith.constant 0 : index
    %c0_7 = arith.constant 0 : index
    %13 = vector.load %arg4[%c0_5, %c0_6, %c0_7] : memref<1x32x128xf32, #tpu.memory_space<vmem>>, vector<1x32x128xf32>
    %14 = vector.shape_cast %13 : vector<1x32x128xf32> to vector<32x128xf32>
    %15 = vector.shape_cast %12 : vector<32x128xf32> to vector<1x32x128xf32>
    tpu.vector_store %arg4[%c0_5, %c0_6, %c0_7], %15 {strides = array<i32>} : memref<1x32x128xf32, #tpu.memory_space<vmem>>, vector<1x32x128xf32>,
    return
  }
  func.func @transform_0(%arg0: i32, %arg1: i32) -> (i32, i32, i32) {
    %c0_i32 = arith.constant 0 : i32
    %c0_i32_0 = arith.constant 0 : i32
    %c0_i32_1 = arith.constant 0 : i32
    return %arg0, %c0_i32, %c0_i32_0 : i32, i32, i32
  }
  func.func @transform_1(%arg0: i32, %arg1: i32) -> (i32, i32, i32) {
    %c0_i32 = arith.constant 0 : i32
    %c0_i32_0 = arith.constant 0 : i32
    %c0_i32_1 = arith.constant 0 : i32
    return %arg0, %c0_i32, %c0_i32_0 : i32, i32, i32
  }
  func.func @transform_2(%arg0: i32, %arg1: i32) -> (i32, i32, i32) {
    %c0_i32 = arith.constant 0 : i32
    %c0_i32_0 = arith.constant 0 : i32
    return %arg0, %c0_i32, %arg1 : i32, i32, i32
  }
}

</mosaic_0001>

<llo_original>
// kernel: tpu_custom_call.1
$region0: #{tpu_custom_call.1}
  #allocation0 [shape = 'u32[]', space=smem, size = 0x4, offset = 0x4, fixed_abs, tag = 'smem constant byte address 0x4 - core index']
  #allocation1 [shape = 'u32[144,128]{1,0:T(1,128)}', space=vmem, size = 0x12000, scoped, tag = 'internal scratch']
  %s0 = inlined_call_operand.vmem [shape: f32[3,32,8], index: 0, kind: input, shape index: {}]
  %s1 = inlined_call_operand.vmem [shape: s32[3,8,1], index: 1, kind: input, shape index: {}]
  %s2 = inlined_call_operand.hbm [shape: f32[3,32,320], index: 2, kind: output, shape index: {}]
  %s3 = sld [smem:[#allocation0]]
  $region41: #{tpu_custom_call.1} parent=0
    _
  %s5 = ssub.s32 1, %s3
  %s6 = scalar_select 0, %s5, %s3
  $region1: #{tpu_custom_call.1} parent=0
    #allocation2 [shape = 'u8[32768]{0}', space=vmem, size = 0x8000, scoped, tag = 'output window, operand 0']
    #allocation3 [shape = 's32[2]{0}', space=sflag, size = 0x8, scoped, tag = 'scoped memory for tpu_custom_call.1']
    %7 = vsyncpa [#allocation3], 0
    %s8 = scalar_lea.sflag [#allocation3], 1
    %9 = vsyncpa %s8, 0
    loop: start=0, step=1, limit=11
    $region2: #{tpu_custom_call.1} parent=1 // loop_pre_header
      _
    $region3: #{tpu_custom_call.1} parent=1 // loop_header
      %s11 = sphi 0, %s15
      %p12 = scmp.ge.s32.totalorder %s11, 11
      %s18 = sphi 0, %s30
      %s19 = sphi 0, %s26
      %s20 = sphi 0, %s18
      %s21 = sphi 0, %s19
      %s22 = sphi 0, %s20
      %s23 = sphi 0, %s21
      %s33 = sphi 0, %s35
      %s36 = sphi 0, %s33
      %s37 = sphi 0, %s36
      %s53 = sphi 0, %s37
      %s59 = sphi 0, %s61
      %s62 = sphi 0, %s59
      %s63 = sphi 0, %s62
      %s79 = sphi 0, %s63
      %s87 = sphi 0, %s89
      %s90 = sphi 0, %s87
      %s91 = sphi 0, %s90
      %s107 = sphi 0, %s91
    $region4: #{tpu_custom_call.1} parent=1 // loop_header_branch
      %14 = sbr.rel (%p12) target = $region8
    $region5: #{tpu_custom_call.1} parent=1 // loop_body
      %s16 = ssub.s32 %s11, 1
      %s17 = ssub.s32 %s11, 2
      %s24 = sadd.s32 1, %s19
      %p25 = scmp.ge.s32.totalorder %s24, 3
      %s26 = scalar_select %p25, 0, %s24
      %s27 = sadd.s32 1, %s18
      %s28 = scalar_select %p25, %s27, %s18
      %p29 = scmp.ge.s32.totalorder %s28, 3
      %s30 = scalar_select %p29, 0, %s28
      %s31 = ssub.s32 %s18, %s30
      %p32 = scmp.eq.s32.totalorder %s31, 0
      %s34 = sadd.s32 %s33, 1
      %s35 = scalar_select %p32, %s33, %s34
      %p38 = pneg %p32
      %p39 = scmp.eq.s32.totalorder %s11, 8
      %p40 = por %p38, %p39
      %p41 = scmp.ne.s32.totalorder %s33, %s36
      %p42 = scmp.eq.s32.totalorder %s11, 0
      %p43 = por %p41, %p42
      %p44 = scmp.ne.s32.totalorder %s33, %s36
      %p45 = scmp.eq.s32.totalorder %s16, 8
      %p46 = por %p44, %p45
      %p47 = scmp.ne.s32.totalorder %s36, %s37
      %p48 = scmp.eq.s32.totalorder %s16, 0
      %p49 = por %p47, %p48
      %p50 = scmp.ne.s32.totalorder %s36, %s37
      %p51 = scmp.eq.s32.totalorder %s17, 8
      %p52 = por %p50, %p51
      %p54 = scmp.ne.s32.totalorder %s37, %s53
      %p55 = scmp.eq.s32.totalorder %s17, 0
      %p56 = por %p54, %p55
      %s57 = ssub.s32 %s18, %s30
      %p58 = scmp.eq.s32.totalorder %s57, 0
      %s60 = sadd.s32 %s59, 1
      %s61 = scalar_select %p58, %s59, %s60
      %p64 = pneg %p58
      %p65 = scmp.eq.s32.totalorder %s11, 8
      %p66 = por %p64, %p65
      %p67 = scmp.ne.s32.totalorder %s59, %s62
      %p68 = scmp.eq.s32.totalorder %s11, 0
      %p69 = por %p67, %p68
      %p70 = scmp.ne.s32.totalorder %s59, %s62
      %p71 = scmp.eq.s32.totalorder %s16, 8
      %p72 = por %p70, %p71
      %p73 = scmp.ne.s32.totalorder %s62, %s63
      %p74 = scmp.eq.s32.totalorder %s16, 0
      %p75 = por %p73, %p74
      %p76 = scmp.ne.s32.totalorder %s62, %s63
      %p77 = scmp.eq.s32.totalorder %s17, 8
      %p78 = por %p76, %p77
      %p80 = scmp.ne.s32.totalorder %s63, %s79
      %p81 = scmp.eq.s32.totalorder %s17, 0
      %p82 = por %p80, %p81
      %s83 = ssub.s32 %s18, %s30
      %s84 = ssub.s32 %s19, %s26
      %s85 = sor.u32 %s83, %s84
      %p86 = scmp.eq.s32.totalorder %s85, 0
      %s88 = sadd.s32 %s87, 1
      %s89 = scalar_select %p86, %s87, %s88
      %p92 = pneg %p86
      %p93 = scmp.eq.s32.totalorder %s11, 8
      %p94 = por %p92, %p93
      %p95 = scmp.ne.s32.totalorder %s87, %s90
      %p96 = scmp.eq.s32.totalorder %s11, 0
      %p97 = por %p95, %p96
      %p98 = scmp.ne.s32.totalorder %s87, %s90
      %p99 = scmp.eq.s32.totalorder %s16, 8
      %p100 = por %p98, %p99
      %p101 = scmp.ne.s32.totalorder %s90, %s91
      %p102 = scmp.eq.s32.totalorder %s16, 0
      %p103 = por %p101, %p102
      %p104 = scmp.ne.s32.totalorder %s90, %s91
      %p105 = scmp.eq.s32.totalorder %s17, 8
      %p106 = por %p104, %p105
      %p108 = scmp.ne.s32.totalorder %s91, %s107
      %p109 = scmp.eq.s32.totalorder %s17, 0
      %p110 = por %p108, %p109
      %p111 = scmp.le.s32.totalorder 1, %s11
      %p112 = scmp.lt.s32.totalorder %s11, 10
      %p113 = pnand %p111, %p112
      %p114 = pneg %p113
      // Predicated region
      $region9: #{tpu_custom_call.1} parent=5 // pred_check
        _
      $region10: #{tpu_custom_call.1} parent=5 // pred_check_branch
        %116 = sbr.rel (%p113) target = $region12
      $region11: #{tpu_custom_call.1} parent=5 // pred_region
        %s117 = ssub.s32 %s11, 1
      $region12: #{tpu_custom_call.1} parent=5 // pred_fallthru
        _
      %p118 = scmp.lt.s32.totalorder %s11, 9
      // Predicated region
      $region13: #{tpu_custom_call.1} parent=5 // pred_check
        %p119 = pneg %p118
      $region14: #{tpu_custom_call.1} parent=5 // pred_check_branch
        %121 = sbr.rel (%p119) target = $region16
      $region15: #{tpu_custom_call.1} parent=5 // pred_region
        // Predicated region
        $region17: #{tpu_custom_call.1} parent=15 // pred_check
          %p122 = pneg %p43
        $region18: #{tpu_custom_call.1} parent=15 // pred_check_branch
          %124 = sbr.rel (%p122) target = $region20
        $region19: #{tpu_custom_call.1} parent=15 // pred_region
          %p125 = scmp.lt.s32.totalorder %s18, 2
          %s126 = scalar_select %p125, %s18, 2
          %s127 = smul.addr %s126, 4
          %s128 = smul.addr %s127, 8
          %s129 = scalar_lea.vmem %s0, %s128
        $region20: #{tpu_custom_call.1} parent=15 // pred_fallthru
          _
        // Predicated region
        $region21: #{tpu_custom_call.1} parent=15 // pred_check
          %p130 = pneg %p69
        $region22: #{tpu_custom_call.1} parent=15 // pred_check_branch
          %132 = sbr.rel (%p130) target = $region24
        $region23: #{tpu_custom_call.1} parent=15 // pred_region
          %p133 = scmp.lt.s32.totalorder %s18, 2
          %s134 = scalar_select %p133, %s18, 2
          %s135 = smul.addr %s134, 8
          %s136 = scalar_lea.vmem %s1, %s135
        $region24: #{tpu_custom_call.1} parent=15 // pred_fallthru
          _
      $region16: #{tpu_custom_call.1} parent=5 // pred_fallthru
        _
      %p137 = scmp.le.s32.totalorder 1, %s11
      %p138 = scmp.lt.s32.totalorder %s11, 10
      %p139 = pnand %p137, %p138
      %p140 = pneg %p139
      // Predicated region
      $region25: #{tpu_custom_call.1} parent=5 // pred_check
        _
      $region26: #{tpu_custom_call.1} parent=5 // pred_check_branch
        %142 = sbr.rel (%p139) target = $region28
      $region27: #{tpu_custom_call.1} parent=5 // pred_region
        %s143 = ssub.s32 %s11, 1
        %p144 = scmp.lt.s32.totalorder %s20, 2
        %s145 = scalar_select %p144, %s20, 2
        %s146 = smul.addr %s145, 4
        %s147 = smul.addr %s146, 8
        %s148 = scalar_lea.vmem %s0, %s147
        %p149 = pneg %p49
        %p150 = pneg %p46
        %p151 = scmp.lt.s32.totalorder %s20, 2
        %s152 = scalar_select %p151, %s20, 2
        %s153 = smul.addr %s152, 8
        %s154 = scalar_lea.vmem %s1, %s153
        %p155 = pneg %p75
        %p156 = pneg %p72
        %p157 = pneg %p103
        %p158 = pneg %p100
        %s159 = sand.u32 %s90, 1
        %s160 = scalar_lea.sflag [#allocation3], %s159
        %s161 = sand.u32 %s90, 1
        %s162 = smul.addr %s161, 32
        %s163 = scalar_lea.vmem [#allocation2], %s162
        %p164 = scmp.lt.s32.totalorder %s20, 2
        %s165 = scalar_select %p164, %s20, 2
        %s166 = smul.addr %s165, 4
        %s167 = smul.addr %s166, 8
        %s168 = scalar_lea.vmem %s0, %s167
        %p169 = scmp.lt.s32.totalorder %s20, 2
        %s170 = scalar_select %p169, %s20, 2
        %s171 = smul.addr %s170, 8
        %s172 = scalar_lea.vmem %s1, %s171
        %s173 = smul.u32 %s21, 128
        %v174 = vld [vmem:[%s172] sm:$0xff]
        %v175 = vstv %s173
        %v176 = vsub.s32 %v174, %v175
        %v177 = vlaneseq
        %v178 = vand.u32 %v177, 127
        %179 = vset.pattern.permute.xlu0 0
        %180 = vperm.xlu0 %179, %v176
        %v181 = vpop.permute.xlu0 %180
        %vm182 = vcmp.eq.s32.totalorder %v178, %v181
        %v183 = vsel %vm182, 1, 0
        %v184 = vcvt.s32.f32 %v183
        %v185 = vld [vmem:[%s168] sm:$0xff]
        %v186 = vld [vmem:[%s168 + $0x8] sm:$0xff]
        %v187 = vld [vmem:[%s168 + $0x10] sm:$0xff]
        %v188 = vld [vmem:[%s168 + $0x18] sm:$0xff]
        %vm189 = vcmask 64512
        %v191 = vsel %vm189, %v185, 0
        %v194 = vsel %vm189, %v186, 0
        %v197 = vsel %vm189, %v187, 0
        %v200 = vsel %vm189, %v188, 0
        %202 = vmatprep.subr.mxu0 0.0
        %203 = vmatpush1.msra.mxu0 %v184
        %204 = vmatprep.subr.mxu0 0.0
        %205 = vmatpush1.msra.mxu0 0.0
        %206 = vmatprep.subr.mxu0 0.0
        %207 = vmatpush1.msra.mxu0 0.0
        %208 = vmatprep.subr.mxu0 0.0
        %209 = vmatpush1.msra.mxu0 0.0
        %210 = vmatprep.subr.mxu0 0.0
        %211 = vmatpush1.msra.mxu0 0.0
        %212 = vmatprep.subr.mxu0 0.0
        %213 = vmatpush1.msra.mxu0 0.0
        %214 = vmatprep.subr.mxu0 0.0
        %215 = vmatpush1.msra.mxu0 0.0
        %216 = vmatprep.subr.mxu0 0.0
        %217 = vmatpush1.msra.mxu0 0.0
        %218 = vmatprep.subr.mxu0 0.0
        %219 = vmatpush1.msra.mxu0 0.0
        %220 = vmatprep.subr.mxu0 0.0
        %221 = vmatpush1.msra.mxu0 0.0
        %222 = vmatprep.subr.mxu0 0.0
        %223 = vmatpush1.msra.mxu0 0.0
        %224 = vmatprep.subr.mxu0 0.0
        %225 = vmatpush1.msra.mxu0 0.0
        %226 = vmatprep.subr.mxu0 0.0
        %227 = vmatpush1.msra.mxu0 0.0
        %228 = vmatprep.subr.mxu0 0.0
        %229 = vmatpush1.msra.mxu0 0.0
        %230 = vmatprep.subr.mxu0 0.0
        %231 = vmatpush1.msra.mxu0 0.0
        %232 = vmatprep.subr.mxu0 0.0
        %233 = vmatpush1.msra.mxu0 0.0
        %234 = vmatprep.subr.mxu0 0.0
        %235 = vmatpush1.msra.mxu0 0.0
        %236 = vmatprep.subr.mxu0 0.0
        %237 = vmatpush1.msra.mxu0 0.0
        %238 = vmatprep.subr.mxu0 0.0
        %239 = vmatpush1.msra.mxu0 0.0
        %240 = vmatprep.subr.mxu0 0.0
        %241 = vmatpush1.msra.mxu0 0.0
        %242 = vmatprep.subr.mxu0 0.0
        %243 = vmatpush1.msra.mxu0 0.0
        %244 = vmatprep.subr.mxu0 0.0
        %245 = vmatpush1.msra.mxu0 0.0
        %246 = vmatprep.subr.mxu0 0.0
        %247 = vmatpush1.msra.mxu0 0.0
        %248 = vmatprep.subr.mxu0 0.0
        %249 = vmatpush1.msra.mxu0 0.0
        %250 = vmatprep.subr.mxu0 0.0
        %251 = vmatpush1.msra.mxu0 0.0
        %252 = vmatprep.subr.mxu0 0.0
        %253 = vmatpush1.msra.mxu0 0.0
        %254 = vmatprep.subr.mxu0 0.0
        %255 = vmatpush1.msra.mxu0 0.0
        %256 = vmatprep.subr.mxu0 0.0
        %257 = vmatpush1.msra.mxu0 0.0
        %258 = vmatprep.subr.mxu0 0.0
        %259 = vmatpush1.msra.mxu0 0.0
        %260 = vmatprep.subr.mxu0 0.0
        %261 = vmatpush1.msra.mxu0 0.0
        %262 = vmatprep.subr.mxu0 0.0
        %263 = vmatpush1.msra.mxu0 0.0
        %264 = vmatprep.subr.mxu0 0.0
        %265 = vmatpush1.msra.mxu0 0.0
        %266 = vmatprep.mubr.f32.mxu0 0.0
        %267 = vmatmul.mubr.f32.gmra.mrb[0].mxu0 %v191
        %v268 = vpop.f32.mrb[0].mxu0
        %v269 = vadd.f32 0.0, %v268
        %v270 = vpop.f32.mrb[0].mxu0
        %271 = vmatprep.mubr.f32.mxu0 0.0
        %272 = vmatmul.mubr.f32.gmra.mrb[0].mxu0 %v194
        %v273 = vpop.f32.mrb[0].mxu0
        %v274 = vadd.f32 0.0, %v273
        %v275 = vpop.f32.mrb[0].mxu0
        %276 = vmatprep.mubr.f32.mxu0 0.0
        %277 = vmatmul.mubr.f32.gmra.mrb[0].mxu0 %v197
        %v278 = vpop.f32.mrb[0].mxu0
        %v279 = vadd.f32 0.0, %v278
        %v280 = vpop.f32.mrb[0].mxu0
        %281 = vmatprep.mubr.f32.mxu0 0.0
        %282 = vmatmul.mubr.f32.gmra.mrb[0].mxu0 %v200
        %v283 = vpop.f32.mrb[0].mxu0
        %v284 = vadd.f32 0.0, %v283
        %v285 = vpop.f32.mrb[0].mxu0
        %286 = vdwg.mxu0
        %287 = vst [vmem:[%s163] sm:$0xff] %v269
        %288 = vst [vmem:[%s163 + $0x8] sm:$0xff] %v274
        %289 = vst [vmem:[%s163 + $0x10] sm:$0xff] %v279
        %290 = vst [vmem:[%s163 + $0x18] sm:$0xff] %v284
        %s291 = sand.u32 %s90, 1
        %s292 = scalar_lea.sflag [#allocation3], %s291
        %s293 = sand.u32 %s90, 1
        %s294 = smul.addr %s293, 32
        %s295 = scalar_lea.vmem [#allocation2], %s294
        // Predicated region
        $region29: #{tpu_custom_call.1} parent=27 // pred_check
          %p296 = pneg %p100
        $region30: #{tpu_custom_call.1} parent=27 // pred_check_branch
          %298 = sbr.rel (%p296) target = $region32
        $region31: #{tpu_custom_call.1} parent=27 // pred_region
          %s300 = ssub.s32 512, 512
          %301 = vsyncadd %s292, %s300
          %s302 = smul.addr %s20, 12
          %s303 = sadd.s32 %s21, %s302
          %s304 = smul.addr %s303, 128
          %s305 = scalar_lea.hbm %s2, %s304
          %s306 = sshll.u32 %s295, 4
          %s307 = int_to_ptr.vmem [resolvable:$true] %s306
          %312 = dma.vmem_to_hbm [thread:$0]  %s307, 512, %s305, %s292, 128, 384, 8
        $region32: #{tpu_custom_call.1} parent=27 // pred_fallthru
          _
      $region28: #{tpu_custom_call.1} parent=5 // pred_fallthru
        _
      %p313 = scmp.le.s32.totalorder 2, %s11
      // Predicated region
      $region33: #{tpu_custom_call.1} parent=5 // pred_check
        %p314 = pneg %p313
      $region34: #{tpu_custom_call.1} parent=5 // pred_check_branch
        %316 = sbr.rel (%p314) target = $region36
      $region35: #{tpu_custom_call.1} parent=5 // pred_region
        %s317 = ssub.s32 %s11, 2
        // Predicated region
        $region37: #{tpu_custom_call.1} parent=35 // pred_check
          %p318 = pneg %p106
        $region38: #{tpu_custom_call.1} parent=35 // pred_check_branch
          %320 = sbr.rel (%p318) target = $region40
        $region39: #{tpu_custom_call.1} parent=35 // pred_region
          %s321 = sand.u32 %s91, 1
          %s322 = scalar_lea.sflag [#allocation3], %s321
          %s323 = sand.u32 %s91, 1
          %s324 = smul.addr %s323, 32
          %s325 = scalar_lea.vmem [#allocation2], %s324
          %326 = dma.done %s322, 512
        $region40: #{tpu_custom_call.1} parent=35 // pred_fallthru
          _
      $region36: #{tpu_custom_call.1} parent=5 // pred_fallthru
        _
    $region6: #{tpu_custom_call.1} parent=1 // loop_footer
      %s15 = sadd.s32 1, %s11
    $region7: #{tpu_custom_call.1} parent=1 // loop_footer_branch
      %10 = sbr.rel target = $region3
    $region8: #{tpu_custom_call.1} parent=1 // loop_exit
      _
    %327 = vsyncpa [#allocation3], 1
    %s328 = scalar_lea.sflag [#allocation3], 1
    %329 = vsyncpa %s328, 1

</llo_original>
